<compile_context>
chip_gen: v7x
topology: tpu7x:2x2x1
jax: 0.10.0
libtpu: 0.0.40
codegen_flags: <defaults>
</compile_context>

<pallas_src>
import jax
import jax.numpy as jnp
import numpy as np
from jax.experimental import pallas as pl
from jax.experimental.pallas import tpu as pltpu

# ----- hyperparameters (module defaults, small batch) -----
N_POSES = 21
POSE_DIM = 6
DIM = N_POSES * POSE_DIM          # 126  (model input/output feature dim)
D_IN = DIM + 1                    # 127  (after concatenating t)
HIDDEN = 64
N_BLOCKS = 2
PAD = 128                         # lane-dense padded feature width for input & output
B = 16                            # batch
TB = 8                            # batch tile -> grid of 2 parallel steps


def _silu(x):
    return x * jax.nn.sigmoid(x)


# ----------------------------- Pallas kernel -----------------------------
def timemlps_kernel(x_ref, w0_ref, b0_ref, wh_ref, bh_ref, wo_ref, bo_ref, out_ref):
    f32 = jnp.float32

    # input layer: Linear(dim+1 -> hidden) + act   (input pre-padded to 128 lanes,
    # padded weight rows are zero so the result is exact)
    h = jnp.dot(x_ref[...], w0_ref[...], preferred_element_type=f32) + b0_ref[...]
    h = _silu(h)

    # hidden blocks: Linear(hidden, hidden) + act + Dropout(identity, eval mode)
    n_blocks = wh_ref.shape[0]
    for l in range(n_blocks):
        h = jnp.dot(h, wh_ref[l], preferred_element_type=f32) + bh_ref[l]
        h = _silu(h)

    # output layer: Linear(hidden -> dim), padded to 128 output lanes (lane-dense store)
    out = jnp.dot(h, wo_ref[...], preferred_element_type=f32) + bo_ref[...]
    out_ref[...] = out.astype(out_ref.dtype)


# ----------------------------- wrapper -----------------------------
def _full_spec(shape):
    nd = len(shape)
    return pl.BlockSpec(shape, lambda i, _nd=nd: (0,) * _nd)


def timemlps_forward(params, batch, t, tb=TB):
    bsz, dfeat = batch.shape
    assert dfeat == DIM and bsz % tb == 0

    # glue (concat + zero-pad to lane-dense 128) in plain JAX
    x = jnp.concatenate([batch, t[:, None]], axis=1)              # [B, dim+1]
    x_pad = jnp.pad(x, ((0, 0), (0, PAD - D_IN)))                 # [B, 128]

    # pad weights so padded input lanes / output lanes contribute exact zeros
    w0_pad = jnp.pad(params['W0'], ((0, PAD - D_IN), (0, 0)))     # [128, HIDDEN]
    wo_pad = jnp.pad(params['WO'], ((0, 0), (0, PAD - DIM)))      # [HIDDEN, 128]
    bo_pad = jnp.pad(params['bO'], ((0, 0), (0, PAD - DIM)))      # [1, 128]

    in_specs = [
        pl.BlockSpec((tb, PAD), lambda i: (i, 0)),                # padded input tile
        _full_spec((PAD, HIDDEN)), _full_spec((1, HIDDEN)),       # input layer
        _full_spec((N_BLOCKS, HIDDEN, HIDDEN)),                   # stacked hidden weights
        _full_spec((N_BLOCKS, 1, HIDDEN)),                        # stacked hidden biases
        _full_spec((HIDDEN, PAD)), _full_spec((1, PAD)),          # output layer (padded)
    ]

    out_pad = pl.pallas_call(
        timemlps_kernel,
        out_shape=jax.ShapeDtypeStruct((bsz, PAD), jnp.float32),
        grid_spec=pltpu.PrefetchScalarGridSpec(
            num_scalar_prefetch=0,
            grid=(bsz // tb,),
            in_specs=in_specs,
            out_specs=pl.BlockSpec((tb, PAD), lambda i: (i, 0)),
        ),
        compiler_params=pltpu.CompilerParams(dimension_semantics=("parallel",)),
    )(x_pad, w0_pad, params['b0'], params['WH'], params['bH'], wo_pad, bo_pad)

    return out_pad[:, :DIM]


# ----------------------------- pure-JAX reference -----------------------------
def timemlps_reference(params, batch, t):
    x = jnp.concatenate([batch, t[:, None]], axis=1)
    h = _silu(x @ params['W0'] + params['b0'])
    for l in range(N_BLOCKS):
        h = _silu(h @ params['WH'][l] + params['bH'][l])
    return h @ params['WO'] + params['bO']


# ----------------------------- param init -----------------------------
def init_params(key):
    ks = jax.random.split(key, 8)
    n = lambda k, shape, s=0.05: s * jax.random.normal(k, shape, jnp.float32)
    return {
        'W0': n(ks[0], (D_IN, HIDDEN)),
        'b0': n(ks[1], (1, HIDDEN), 0.01),
        'WH': n(ks[2], (N_BLOCKS, HIDDEN, HIDDEN)),
        'bH': n(ks[3], (N_BLOCKS, 1, HIDDEN), 0.01),
        'WO': n(ks[4], (HIDDEN, DIM)),
        'bO': n(ks[5], (1, DIM), 0.01),
    }


if __name__ == "__main__":
    key = jax.random.PRNGKey(0)
    kp, kb, kt = jax.random.split(key, 3)
    params = init_params(kp)

    batch = 0.5 * jax.random.normal(kb, (B, DIM), jnp.float32)    # [B, n_poses*pose_dim]
    t = jax.random.uniform(kt, (B,), jnp.float32, 0.0, 1.0)       # diffusion time

    out = timemlps_forward(params, batch, t)
    out = jax.block_until_ready(out)

    ref = timemlps_reference(params, batch, t)
    np.testing.assert_allclose(np.asarray(out), np.asarray(ref), rtol=1e-3, atol=1e-3)

    print("KERNEL_OK")
</pallas_src>

<mosaic_0001>
module attributes {stable_mosaic.version = 11 : i64} {
  func.func @timemlps_kernel(%arg0: i32, %arg1: memref<8x128xf32, #tpu.memory_space<vmem>>, %arg2: memref<128x64xf32, #tpu.memory_space<vmem>>, %arg3: memref<1x64xf32, #tpu.memory_space<vmem>>, %arg4: memref<2x64x64xf32, #tpu.memory_space<vmem>>, %arg5: memref<2x1x64xf32, #tpu.memory_space<vmem>>, %arg6: memref<64x128xf32, #tpu.memory_space<vmem>>, %arg7: memref<1x128xf32, #tpu.memory_space<vmem>>, %arg8: memref<8x128xf32, #tpu.memory_space<vmem>>) attributes {dimension_semantics = [#tpu.dimension_semantics<parallel>], iteration_bounds = array<i64: 2>, scalar_prefetch = 0 : i64, scratch_operands = 0 : i64, tpu.core_type = #tpu.core_type<tc>, window_params = [{transform_indices = @transform_0, window_bounds = array<i64: 8, 128>}, {pipeline_mode = #tpu.pipeline_mode<synchronous>, transform_indices = @transform_1, window_bounds = array<i64: 128, 64>}, {pipeline_mode = #tpu.pipeline_mode<synchronous>, transform_indices = @transform_2, window_bounds = array<i64: 1, 64>}, {pipeline_mode = #tpu.pipeline_mode<synchronous>, transform_indices = @transform_3, window_bounds = array<i64: 2, 64, 64>}, {pipeline_mode = #tpu.pipeline_mode<synchronous>, transform_indices = @transform_4, window_bounds = array<i64: 2, 1, 64>}, {pipeline_mode = #tpu.pipeline_mode<synchronous>, transform_indices = @transform_5, window_bounds = array<i64: 64, 128>}, {pipeline_mode = #tpu.pipeline_mode<synchronous>, transform_indices = @transform_6, window_bounds = array<i64: 1, 128>}, {transform_indices = @transform_7, window_bounds = array<i64: 8, 128>}]} {
    %c0 = arith.constant 0 : index
    %c0_0 = arith.constant 0 : index
    %0 = vector.load %arg1[%c0, %c0_0] : memref<8x128xf32, #tpu.memory_space<vmem>>, vector<8x128xf32>
    %c0_1 = arith.constant 0 : index
    %c0_2 = arith.constant 0 : index
    %1 = vector.load %arg2[%c0_1, %c0_2] : memref<128x64xf32, #tpu.memory_space<vmem>>, vector<128x64xf32>
    %cst = arith.constant dense<0.000000e+00> : vector<8x64xf32>
    %2 = tpu.matmul %0, %1, %cst {dimension_numbers = #tpu.dot_dimension_numbers<[1], [0], [0], [1], [0, 0, 1, 1], [], []>} : vector<8x128xf32>, vector<128x64xf32>, vector<8x64xf32> -> vector<8x64xf32>
    %c0_3 = arith.constant 0 : index
    %c0_4 = arith.constant 0 : index
    %3 = vector.load %arg3[%c0_3, %c0_4] : memref<1x64xf32, #tpu.memory_space<vmem>>, vector<1x64xf32>
    %4 = vector.broadcast %3 : vector<1x64xf32> to vector<8x64xf32>
    %5 = arith.addf %2, %4 : vector<8x64xf32>
    %6 = arith.negf %5 : vector<8x64xf32>
    %7 = math.exp %6 : vector<8x64xf32>
    %cst_5 = arith.constant 1.000000e+00 : f32
    %8 = vector.broadcast %cst_5 : f32 to vector<8x64xf32>
    %9 = arith.addf %8, %7 : vector<8x64xf32>
    %10 = arith.divf %8, %9 : vector<8x64xf32>
    %11 = arith.mulf %5, %10 : vector<8x64xf32>
    %c0_6 = arith.constant 0 : index
    %c0_7 = arith.constant 0 : index
    %c0_8 = arith.constant 0 : index
    %12 = vector.load %arg4[%c0_6, %c0_7, %c0_8] : memref<2x64x64xf32, #tpu.memory_space<vmem>>, vector<1x64x64xf32>
    %13 = vector.shape_cast %12 : vector<1x64x64xf32> to vector<64x64xf32>
    %cst_9 = arith.constant dense<0.000000e+00> : vector<8x64xf32>
    %14 = tpu.matmul %11, %13, %cst_9 {dimension_numbers = #tpu.dot_dimension_numbers<[1], [0], [0], [1], [0, 0, 1, 1], [], []>} : vector<8x64xf32>, vector<64x64xf32>, vector<8x64xf32> -> vector<8x64xf32>
    %c0_10 = arith.constant 0 : index
    %c0_11 = arith.constant 0 : index
    %c0_12 = arith.constant 0 : index
    %15 = vector.load %arg5[%c0_10, %c0_11, %c0_12] : memref<2x1x64xf32, #tpu.memory_space<vmem>>, vector<1x1x64xf32>
    %16 = vector.shape_cast %15 : vector<1x1x64xf32> to vector<1x64xf32>
    %17 = vector.broadcast %16 : vector<1x64xf32> to vector<8x64xf32>
    %18 = arith.addf %14, %17 : vector<8x64xf32>
    %19 = arith.negf %18 : vector<8x64xf32>
    %20 = math.exp %19 : vector<8x64xf32>
    %cst_13 = arith.constant 1.000000e+00 : f32
    %21 = vector.broadcast %cst_13 : f32 to vector<8x64xf32>
    %22 = arith.addf %21, %20 : vector<8x64xf32>
    %23 = arith.divf %21, %22 : vector<8x64xf32>
    %24 = arith.mulf %18, %23 : vector<8x64xf32>
    %c1 = arith.constant 1 : index
    %c0_14 = arith.constant 0 : index
    %c0_15 = arith.constant 0 : index
    %25 = vector.load %arg4[%c1, %c0_14, %c0_15] : memref<2x64x64xf32, #tpu.memory_space<vmem>>, vector<1x64x64xf32>
    %26 = vector.shape_cast %25 : vector<1x64x64xf32> to vector<64x64xf32>
    %cst_16 = arith.constant dense<0.000000e+00> : vector<8x64xf32>
    %27 = tpu.matmul %24, %26, %cst_16 {dimension_numbers = #tpu.dot_dimension_numbers<[1], [0], [0], [1], [0, 0, 1, 1], [], []>} : vector<8x64xf32>, vector<64x64xf32>, vector<8x64xf32> -> vector<8x64xf32>
    %c1_17 = arith.constant 1 : index
    %c0_18 = arith.constant 0 : index
    %c0_19 = arith.constant 0 : index
    %28 = vector.load %arg5[%c1_17, %c0_18, %c0_19] : memref<2x1x64xf32, #tpu.memory_space<vmem>>, vector<1x1x64xf32>
    %29 = vector.shape_cast %28 : vector<1x1x64xf32> to vector<1x64xf32>
    %30 = vector.broadcast %29 : vector<1x64xf32> to vector<8x64xf32>
    %31 = arith.addf %27, %30 : vector<8x64xf32>
    %32 = arith.negf %31 : vector<8x64xf32>
    %33 = math.exp %32 : vector<8x64xf32>
    %cst_20 = arith.constant 1.000000e+00 : f32
    %34 = vector.broadcast %cst_20 : f32 to vector<8x64xf32>
    %35 = arith.addf %34, %33 : vector<8x64xf32>
    %36 = arith.divf %34, %35 : vector<8x64xf32>
    %37 = arith.mulf %31, %36 : vector<8x64xf32>
    %c0_21 = arith.constant 0 : index
    %c0_22 = arith.constant 0 : index
    %38 = vector.load %arg6[%c0_21, %c0_22] : memref<64x128xf32, #tpu.memory_space<vmem>>, vector<64x128xf32>
    %cst_23 = arith.constant dense<0.000000e+00> : vector<8x128xf32>
    %39 = tpu.matmul %37, %38, %cst_23 {dimension_numbers = #tpu.dot_dimension_numbers<[1], [0], [0], [1], [0, 0, 1, 1], [], []>} : vector<8x64xf32>, vector<64x128xf32>, vector<8x128xf32> -> vector<8x128xf32>
    %c0_24 = arith.constant 0 : index
    %c0_25 = arith.constant 0 : index
    %40 = vector.load %arg7[%c0_24, %c0_25] : memref<1x128xf32, #tpu.memory_space<vmem>>, vector<1x128xf32>
    %41 = vector.broadcast %40 : vector<1x128xf32> to vector<8x128xf32>
    %42 = arith.addf %39, %41 : vector<8x128xf32>
    %c0_26 = arith.constant 0 : index
    %c0_27 = arith.constant 0 : index
    %43 = vector.load %arg8[%c0_26, %c0_27] : memref<8x128xf32, #tpu.memory_space<vmem>>, vector<8x128xf32>
    tpu.vector_store %arg8[%c0_26, %c0_27], %42 {strides = array<i32>} : memref<8x128xf32, #tpu.memory_space<vmem>>, vector<8x128xf32>,
    return
  }
  func.func @transform_0(%arg0: i32) -> (i32, i32) {
    %c0_i32 = arith.constant 0 : i32
    %c0_i32_0 = arith.constant 0 : i32
    return %arg0, %c0_i32 : i32, i32
  }
  func.func @transform_1(%arg0: i32) -> (i32, i32) {
    %c0_i32 = arith.constant 0 : i32
    %c0_i32_0 = arith.constant 0 : i32
    %c0_i32_1 = arith.constant 0 : i32
    return %c0_i32, %c0_i32_0 : i32, i32
  }
  func.func @transform_2(%arg0: i32) -> (i32, i32) {
    %c0_i32 = arith.constant 0 : i32
    %c0_i32_0 = arith.constant 0 : i32
    %c0_i32_1 = arith.constant 0 : i32
    return %c0_i32, %c0_i32_0 : i32, i32
  }
  func.func @transform_3(%arg0: i32) -> (i32, i32, i32) {
    %c0_i32 = arith.constant 0 : i32
    %c0_i32_0 = arith.constant 0 : i32
    %c0_i32_1 = arith.constant 0 : i32
    %c0_i32_2 = arith.constant 0 : i32
    return %c0_i32, %c0_i32_0, %c0_i32_1 : i32, i32, i32
  }
  func.func @transform_4(%arg0: i32) -> (i32, i32, i32) {
    %c0_i32 = arith.constant 0 : i32
    %c0_i32_0 = arith.constant 0 : i32
    %c0_i32_1 = arith.constant 0 : i32
    %c0_i32_2 = arith.constant 0 : i32
    return %c0_i32, %c0_i32_0, %c0_i32_1 : i32, i32, i32
  }
  func.func @transform_5(%arg0: i32) -> (i32, i32) {
    %c0_i32 = arith.constant 0 : i32
    %c0_i32_0 = arith.constant 0 : i32
    %c0_i32_1 = arith.constant 0 : i32
    return %c0_i32, %c0_i32_0 : i32, i32
  }
  func.func @transform_6(%arg0: i32) -> (i32, i32) {
    %c0_i32 = arith.constant 0 : i32
    %c0_i32_0 = arith.constant 0 : i32
    %c0_i32_1 = arith.constant 0 : i32
    return %c0_i32, %c0_i32_0 : i32, i32
  }
  func.func @transform_7(%arg0: i32) -> (i32, i32) {
    %c0_i32 = arith.constant 0 : i32
    %c0_i32_0 = arith.constant 0 : i32
    return %arg0, %c0_i32 : i32, i32
  }
}

</mosaic_0001>

<llo_original>
// kernel: tpu_custom_call.1
$region0: #{tpu_custom_call.1}
  #allocation0 [shape = 'u32[]', space=smem, size = 0x4, offset = 0x4, fixed_abs, tag = 'smem constant byte address 0x4 - core index']
  #allocation1 [shape = 'u32[144,128]{1,0:T(1,128)}', space=vmem, size = 0x12000, scoped, tag = 'internal scratch']
  %s0 = inlined_call_operand.hbm [shape: f32[16,128], index: 0, kind: input, shape index: {}]
  %s1 = inlined_call_operand.vmem [shape: f32[128,64], index: 1, kind: input, shape index: {}]
  %s2 = inlined_call_operand.vmem [shape: f32[1,64], index: 2, kind: input, shape index: {}]
  %s3 = inlined_call_operand.vmem [shape: f32[2,64,64], index: 3, kind: input, shape index: {}]
  %s4 = inlined_call_operand.vmem [shape: f32[2,1,64], index: 4, kind: input, shape index: {}]
  %s5 = inlined_call_operand.vmem [shape: f32[64,128], index: 5, kind: input, shape index: {}]
  %s6 = inlined_call_operand.vmem [shape: f32[1,128], index: 6, kind: input, shape index: {}]
  %s7 = inlined_call_operand.hbm [shape: f32[16,128], index: 7, kind: output, shape index: {}]
  %s8 = sld [smem:[#allocation0]]
  $region65: #{tpu_custom_call.1} parent=0
    _
  %s10 = ssub.s32 1, %s8
  %s11 = scalar_select 0, %s10, %s8
  $region1: #{tpu_custom_call.1} parent=0
    #allocation2 [shape = 'u8[8192]{0}', space=vmem, size = 0x2000, scoped, tag = 'input window, operand 0']
    #allocation3 [shape = 's32[2]{0}', space=sflag, size = 0x8, scoped, tag = 'scoped memory for tpu_custom_call.1']
    #allocation4 [shape = 's32[2]{0}', space=sflag, size = 0x8, scoped, tag = 'scoped memory for tpu_custom_call.1']
    #allocation5 [shape = 'u8[8192]{0}', space=vmem, size = 0x2000, scoped, tag = 'output window, operand 0']
    %12 = vsyncpa [#allocation3], 0
    %s13 = scalar_lea.sflag [#allocation3], 1
    %14 = vsyncpa %s13, 0
    %15 = vsyncpa [#allocation4], 0
    %s16 = scalar_lea.sflag [#allocation4], 1
    %17 = vsyncpa %s16, 0
    loop: start=0, step=1, limit=4
    $region2: #{tpu_custom_call.1} parent=1 // loop_pre_header
      _
    $region3: #{tpu_custom_call.1} parent=1 // loop_header
      %s19 = sphi 0, %s23
      %p20 = scmp.ge.s32.totalorder %s19, 4
      %s29 = sphi 0, %s31
      %s32 = sphi 0, %s29
      %s33 = sphi 0, %s32
      %s49 = sphi 0, %s33
      %s53 = sphi 0, %s53
      %s55 = sphi 0, %s53
      %s56 = sphi 0, %s55
      %s70 = sphi 0, %s56
      %s74 = sphi 0, %s74
      %s76 = sphi 0, %s74
      %s77 = sphi 0, %s76
      %s91 = sphi 0, %s77
      %s95 = sphi 0, %s95
      %s97 = sphi 0, %s95
      %s98 = sphi 0, %s97
      %s112 = sphi 0, %s98
      %s116 = sphi 0, %s116
      %s118 = sphi 0, %s116
      %s119 = sphi 0, %s118
      %s133 = sphi 0, %s119
      %s137 = sphi 0, %s137
      %s139 = sphi 0, %s137
      %s140 = sphi 0, %s139
      %s154 = sphi 0, %s140
      %s158 = sphi 0, %s158
      %s160 = sphi 0, %s158
      %s161 = sphi 0, %s160
      %s175 = sphi 0, %s161
      %s181 = sphi 0, %s183
      %s184 = sphi 0, %s181
      %s185 = sphi 0, %s184
      %s201 = sphi 0, %s185
    $region4: #{tpu_custom_call.1} parent=1 // loop_header_branch
      %22 = sbr.rel (%p20) target = $region8
    $region5: #{tpu_custom_call.1} parent=1 // loop_body
      %s24 = ssub.s32 %s19, 1
      %s25 = ssub.s32 %s19, 2
      %s26 = sadd.s32 %s19, 1
      %s27 = ssub.s32 %s19, %s26
      %p28 = scmp.eq.s32.totalorder %s27, 0
      %s30 = sadd.s32 %s29, 1
      %s31 = scalar_select %p28, %s29, %s30
      %p34 = pneg %p28
      %p35 = scmp.eq.s32.totalorder %s19, 1
      %p36 = por %p34, %p35
      %p37 = scmp.ne.s32.totalorder %s29, %s32
      %p38 = scmp.eq.s32.totalorder %s19, 0
      %p39 = por %p37, %p38
      %p40 = scmp.ne.s32.totalorder %s29, %s32
      %p41 = scmp.eq.s32.totalorder %s24, 1
      %p42 = por %p40, %p41
      %p43 = scmp.ne.s32.totalorder %s32, %s33
      %p44 = scmp.eq.s32.totalorder %s24, 0
      %p45 = por %p43, %p44
      %p46 = scmp.ne.s32.totalorder %s32, %s33
      %p47 = scmp.eq.s32.totalorder %s25, 1
      %p48 = por %p46, %p47
      %p50 = scmp.ne.s32.totalorder %s33, %s49
      %p51 = scmp.eq.s32.totalorder %s25, 0
      %p52 = por %p50, %p51
      %s54 = sadd.s32 %s53, 1
      %p57 = scmp.eq.s32.totalorder %s19, 1
      %p58 = scmp.ne.s32.totalorder %s53, %s55
      %p59 = scmp.eq.s32.totalorder %s19, 0
      %p60 = por %p58, %p59
      %p61 = scmp.ne.s32.totalorder %s53, %s55
      %p62 = scmp.eq.s32.totalorder %s24, 1
      %p63 = por %p61, %p62
      %p64 = scmp.ne.s32.totalorder %s55, %s56
      %p65 = scmp.eq.s32.totalorder %s24, 0
      %p66 = por %p64, %p65
      %p67 = scmp.ne.s32.totalorder %s55, %s56
      %p68 = scmp.eq.s32.totalorder %s25, 1
      %p69 = por %p67, %p68
      %p71 = scmp.ne.s32.totalorder %s56, %s70
      %p72 = scmp.eq.s32.totalorder %s25, 0
      %p73 = por %p71, %p72
      %s75 = sadd.s32 %s74, 1
      %p78 = scmp.eq.s32.totalorder %s19, 1
      %p79 = scmp.ne.s32.totalorder %s74, %s76
      %p80 = scmp.eq.s32.totalorder %s19, 0
      %p81 = por %p79, %p80
      %p82 = scmp.ne.s32.totalorder %s74, %s76
      %p83 = scmp.eq.s32.totalorder %s24, 1
      %p84 = por %p82, %p83
      %p85 = scmp.ne.s32.totalorder %s76, %s77
      %p86 = scmp.eq.s32.totalorder %s24, 0
      %p87 = por %p85, %p86
      %p88 = scmp.ne.s32.totalorder %s76, %s77
      %p89 = scmp.eq.s32.totalorder %s25, 1
      %p90 = por %p88, %p89
      %p92 = scmp.ne.s32.totalorder %s77, %s91
      %p93 = scmp.eq.s32.totalorder %s25, 0
      %p94 = por %p92, %p93
      %s96 = sadd.s32 %s95, 1
      %p99 = scmp.eq.s32.totalorder %s19, 1
      %p100 = scmp.ne.s32.totalorder %s95, %s97
      %p101 = scmp.eq.s32.totalorder %s19, 0
      %p102 = por %p100, %p101
      %p103 = scmp.ne.s32.totalorder %s95, %s97
      %p104 = scmp.eq.s32.totalorder %s24, 1
      %p105 = por %p103, %p104
      %p106 = scmp.ne.s32.totalorder %s97, %s98
      %p107 = scmp.eq.s32.totalorder %s24, 0
      %p108 = por %p106, %p107
      %p109 = scmp.ne.s32.totalorder %s97, %s98
      %p110 = scmp.eq.s32.totalorder %s25, 1
      %p111 = por %p109, %p110
      %p113 = scmp.ne.s32.totalorder %s98, %s112
      %p114 = scmp.eq.s32.totalorder %s25, 0
      %p115 = por %p113, %p114
      %s117 = sadd.s32 %s116, 1
      %p120 = scmp.eq.s32.totalorder %s19, 1
      %p121 = scmp.ne.s32.totalorder %s116, %s118
      %p122 = scmp.eq.s32.totalorder %s19, 0
      %p123 = por %p121, %p122
      %p124 = scmp.ne.s32.totalorder %s116, %s118
      %p125 = scmp.eq.s32.totalorder %s24, 1
      %p126 = por %p124, %p125
      %p127 = scmp.ne.s32.totalorder %s118, %s119
      %p128 = scmp.eq.s32.totalorder %s24, 0
      %p129 = por %p127, %p128
      %p130 = scmp.ne.s32.totalorder %s118, %s119
      %p131 = scmp.eq.s32.totalorder %s25, 1
      %p132 = por %p130, %p131
      %p134 = scmp.ne.s32.totalorder %s119, %s133
      %p135 = scmp.eq.s32.totalorder %s25, 0
      %p136 = por %p134, %p135
      %s138 = sadd.s32 %s137, 1
      %p141 = scmp.eq.s32.totalorder %s19, 1
      %p142 = scmp.ne.s32.totalorder %s137, %s139
      %p143 = scmp.eq.s32.totalorder %s19, 0
      %p144 = por %p142, %p143
      %p145 = scmp.ne.s32.totalorder %s137, %s139
      %p146 = scmp.eq.s32.totalorder %s24, 1
      %p147 = por %p145, %p146
      %p148 = scmp.ne.s32.totalorder %s139, %s140
      %p149 = scmp.eq.s32.totalorder %s24, 0
      %p150 = por %p148, %p149
      %p151 = scmp.ne.s32.totalorder %s139, %s140
      %p152 = scmp.eq.s32.totalorder %s25, 1
      %p153 = por %p151, %p152
      %p155 = scmp.ne.s32.totalorder %s140, %s154
      %p156 = scmp.eq.s32.totalorder %s25, 0
      %p157 = por %p155, %p156
      %s159 = sadd.s32 %s158, 1
      %p162 = scmp.eq.s32.totalorder %s19, 1
      %p163 = scmp.ne.s32.totalorder %s158, %s160
      %p164 = scmp.eq.s32.totalorder %s19, 0
      %p165 = por %p163, %p164
      %p166 = scmp.ne.s32.totalorder %s158, %s160
      %p167 = scmp.eq.s32.totalorder %s24, 1
      %p168 = por %p166, %p167
      %p169 = scmp.ne.s32.totalorder %s160, %s161
      %p170 = scmp.eq.s32.totalorder %s24, 0
      %p171 = por %p169, %p170
      %p172 = scmp.ne.s32.totalorder %s160, %s161
      %p173 = scmp.eq.s32.totalorder %s25, 1
      %p174 = por %p172, %p173
      %p176 = scmp.ne.s32.totalorder %s161, %s175
      %p177 = scmp.eq.s32.totalorder %s25, 0
      %p178 = por %p176, %p177
      %s179 = ssub.s32 %s19, %s26
      %p180 = scmp.eq.s32.totalorder %s179, 0
      %s182 = sadd.s32 %s181, 1
      %s183 = scalar_select %p180, %s181, %s182
      %p186 = pneg %p180
      %p187 = scmp.eq.s32.totalorder %s19, 1
      %p188 = por %p186, %p187
      %p189 = scmp.ne.s32.totalorder %s181, %s184
      %p190 = scmp.eq.s32.totalorder %s19, 0
      %p191 = por %p189, %p190
      %p192 = scmp.ne.s32.totalorder %s181, %s184
      %p193 = scmp.eq.s32.totalorder %s24, 1
      %p194 = por %p192, %p193
      %p195 = scmp.ne.s32.totalorder %s184, %s185
      %p196 = scmp.eq.s32.totalorder %s24, 0
      %p197 = por %p195, %p196
      %p198 = scmp.ne.s32.totalorder %s184, %s185
      %p199 = scmp.eq.s32.totalorder %s25, 1
      %p200 = por %p198, %p199
      %p202 = scmp.ne.s32.totalorder %s185, %s201
      %p203 = scmp.eq.s32.totalorder %s25, 0
      %p204 = por %p202, %p203
      %p205 = scmp.le.s32.totalorder 1, %s19
      %p206 = scmp.lt.s32.totalorder %s19, 3
      %p207 = pnand %p205, %p206
      %p208 = pneg %p207
      // Predicated region
      $region9: #{tpu_custom_call.1} parent=5 // pred_check
        _
      $region10: #{tpu_custom_call.1} parent=5 // pred_check_branch
        %210 = sbr.rel (%p207) target = $region12
      $region11: #{tpu_custom_call.1} parent=5 // pred_region
        %s211 = ssub.s32 %s19, 1
        // Predicated region
        $region13: #{tpu_custom_call.1} parent=11 // pred_check
          %p212 = pneg %p66
        $region14: #{tpu_custom_call.1} parent=11 // pred_check_branch
          %214 = sbr.rel (%p212) target = $region16
        $region15: #{tpu_custom_call.1} parent=11 // pred_region
          _
        $region16: #{tpu_custom_call.1} parent=11 // pred_fallthru
          _
        // Predicated region
        $region17: #{tpu_custom_call.1} parent=11 // pred_check
          %p215 = pneg %p87
        $region18: #{tpu_custom_call.1} parent=11 // pred_check_branch
          %217 = sbr.rel (%p215) target = $region20
        $region19: #{tpu_custom_call.1} parent=11 // pred_region
          _
        $region20: #{tpu_custom_call.1} parent=11 // pred_fallthru
          _
        // Predicated region
        $region21: #{tpu_custom_call.1} parent=11 // pred_check
          %p218 = pneg %p108
        $region22: #{tpu_custom_call.1} parent=11 // pred_check_branch
          %220 = sbr.rel (%p218) target = $region24
        $region23: #{tpu_custom_call.1} parent=11 // pred_region
          _
        $region24: #{tpu_custom_call.1} parent=11 // pred_fallthru
          _
        // Predicated region
        $region25: #{tpu_custom_call.1} parent=11 // pred_check
          %p221 = pneg %p129
        $region26: #{tpu_custom_call.1} parent=11 // pred_check_branch
          %223 = sbr.rel (%p221) target = $region28
        $region27: #{tpu_custom_call.1} parent=11 // pred_region
          _
        $region28: #{tpu_custom_call.1} parent=11 // pred_fallthru
          _
        // Predicated region
        $region29: #{tpu_custom_call.1} parent=11 // pred_check
          %p224 = pneg %p150
        $region30: #{tpu_custom_call.1} parent=11 // pred_check_branch
          %226 = sbr.rel (%p224) target = $region32
        $region31: #{tpu_custom_call.1} parent=11 // pred_region
          _
        $region32: #{tpu_custom_call.1} parent=11 // pred_fallthru
          _
        // Predicated region
        $region33: #{tpu_custom_call.1} parent=11 // pred_check
          %p227 = pneg %p171
        $region34: #{tpu_custom_call.1} parent=11 // pred_check_branch
          %229 = sbr.rel (%p227) target = $region36
        $region35: #{tpu_custom_call.1} parent=11 // pred_region
          _
        $region36: #{tpu_custom_call.1} parent=11 // pred_fallthru
          _
      $region12: #{tpu_custom_call.1} parent=5 // pred_fallthru
        _
      %p230 = scmp.lt.s32.totalorder %s19, 2
      // Predicated region
      $region37: #{tpu_custom_call.1} parent=5 // pred_check
        %p231 = pneg %p230
      $region38: #{tpu_custom_call.1} parent=5 // pred_check_branch
        %233 = sbr.rel (%p231) target = $region40
      $region39: #{tpu_custom_call.1} parent=5 // pred_region
        // Predicated region
        $region41: #{tpu_custom_call.1} parent=39 // pred_check
          %p234 = pneg %p39
        $region42: #{tpu_custom_call.1} parent=39 // pred_check_branch
          %236 = sbr.rel (%p234) target = $region44
        $region43: #{tpu_custom_call.1} parent=39 // pred_region
          %s237 = sand.u32 %s29, 1
          %s238 = scalar_lea.sflag [#allocation3], %s237
          %s239 = sand.u32 %s29, 1
          %s240 = smul.addr %s239, 8
          %s241 = scalar_lea.vmem [#allocation2], %s240
          %s243 = ssub.s32 128, 128
          %244 = vsyncadd %s238, %s243
          %s245 = smul.addr %s19, 128
          %s246 = scalar_lea.hbm %s0, %s245
          %s248 = sshll.u32 %s241, 4
          %s249 = int_to_ptr.vmem [resolvable:$true] %s248
          %251 = dma.hbm_to_vmem [thread:$0]  %s246, 128, %s249, %s238
        $region44: #{tpu_custom_call.1} parent=39 // pred_fallthru
          _
      $region40: #{tpu_custom_call.1} parent=5 // pred_fallthru
        _
      %p252 = scmp.le.s32.totalorder 1, %s19
      %p253 = scmp.lt.s32.totalorder %s19, 3
      %p254 = pnand %p252, %p253
      %p255 = pneg %p254
      // Predicated region
      $region45: #{tpu_custom_call.1} parent=5 // pred_check
        _
      $region46: #{tpu_custom_call.1} parent=5 // pred_check_branch
        %257 = sbr.rel (%p254) target = $region48
      $region47: #{tpu_custom_call.1} parent=5 // pred_region
        %s258 = ssub.s32 %s19, 1
        %s259 = sand.u32 %s32, 1
        %s260 = scalar_lea.sflag [#allocation3], %s259
        %s261 = sand.u32 %s32, 1
        %s262 = smul.addr %s261, 8
        %s263 = scalar_lea.vmem [#allocation2], %s262
        // Predicated region
        $region49: #{tpu_custom_call.1} parent=47 // pred_check
          %p264 = pneg %p45
        $region50: #{tpu_custom_call.1} parent=47 // pred_check_branch
          %266 = sbr.rel (%p264) target = $region52
        $region51: #{tpu_custom_call.1} parent=47 // pred_region
          %267 = dma.done %s260, 128
        $region52: #{tpu_custom_call.1} parent=47 // pred_fallthru
          _
        %s268 = sand.u32 %s32, 1
        %s269 = scalar_lea.sflag [#allocation3], %s268
        %s270 = sand.u32 %s32, 1
        %s271 = smul.addr %s270, 8
        %s272 = scalar_lea.vmem [#allocation2], %s271
        %p273 = pneg %p45
        %p274 = pneg %p42
        %p275 = pneg %p66
        %p276 = pneg %p63
        %p277 = pneg %p87
        %p278 = pneg %p84
        %p279 = pneg %p108
        %p280 = pneg %p105
        %p281 = pneg %p129
        %p282 = pneg %p126
        %p283 = pneg %p150
        %p284 = pneg %p147
        %p285 = pneg %p171
        %p286 = pneg %p168
        %p287 = pneg %p197
        %p288 = pneg %p194
        %s289 = sand.u32 %s184, 1
        %s290 = scalar_lea.sflag [#allocation4], %s289
        %s291 = sand.u32 %s184, 1
        %s292 = smul.addr %s291, 8
        %s293 = scalar_lea.vmem [#allocation5], %s292
        %v294 = vld [vmem:[%s263] sm:$0xff]
        %v295 = vld [vmem:[%s1] sm:$0xff]
        %v296 = vld [vmem:[%s1 + $0x8] sm:$0xff]
        %v297 = vld [vmem:[%s1 + $0x10] sm:$0xff]
        %v298 = vld [vmem:[%s1 + $0x18] sm:$0xff]
        %v299 = vld [vmem:[%s1 + $0x20] sm:$0xff]
        %v300 = vld [vmem:[%s1 + $0x28] sm:$0xff]
        %v301 = vld [vmem:[%s1 + $0x30] sm:$0xff]
        %v302 = vld [vmem:[%s1 + $0x38] sm:$0xff]
        %v303 = vld [vmem:[%s1 + $0x40] sm:$0xff]
        %v304 = vld [vmem:[%s1 + $0x48] sm:$0xff]
        %v305 = vld [vmem:[%s1 + $0x50] sm:$0xff]
        %v306 = vld [vmem:[%s1 + $0x58] sm:$0xff]
        %v307 = vld [vmem:[%s1 + $0x60] sm:$0xff]
        %v308 = vld [vmem:[%s1 + $0x68] sm:$0xff]
        %v309 = vld [vmem:[%s1 + $0x70] sm:$0xff]
        %v310 = vld [vmem:[%s1 + $0x78] sm:$0xff]
        %v311 = vld [vmem:[%s2] sm:$0x1]
        %v313 = vlaneseq
        %v314 = vshrl.u32 %v313, 7
        %v315 = vsub.s32 0, %v314
        %v316 = vrot.slane %v311, %v315
        %318 = vmatprep.subr.mxu0 0.0
        %319 = vmatpush1.msra.mxu0 %v295
        %320 = vmatprep.subr.mxu0 0.0
        %321 = vmatpush1.msra.mxu0 %v296
        %322 = vmatprep.subr.mxu0 0.0
        %323 = vmatpush1.msra.mxu0 %v297
        %324 = vmatprep.subr.mxu0 0.0
        %325 = vmatpush1.msra.mxu0 %v298
        %326 = vmatprep.subr.mxu0 0.0
        %327 = vmatpush1.msra.mxu0 %v299
        %328 = vmatprep.subr.mxu0 0.0
        %329 = vmatpush1.msra.mxu0 %v300
        %330 = vmatprep.subr.mxu0 0.0
        %331 = vmatpush1.msra.mxu0 %v301
        %332 = vmatprep.subr.mxu0 0.0
        %333 = vmatpush1.msra.mxu0 %v302
        %334 = vmatprep.subr.mxu0 0.0
        %335 = vmatpush1.msra.mxu0 %v303
        %336 = vmatprep.subr.mxu0 0.0
        %337 = vmatpush1.msra.mxu0 %v304
        %338 = vmatprep.subr.mxu0 0.0
        %339 = vmatpush1.msra.mxu0 %v305
        %340 = vmatprep.subr.mxu0 0.0
        %341 = vmatpush1.msra.mxu0 %v306
        %342 = vmatprep.subr.mxu0 0.0
        %343 = vmatpush1.msra.mxu0 %v307
        %344 = vmatprep.subr.mxu0 0.0
        %345 = vmatpush1.msra.mxu0 %v308
        %346 = vmatprep.subr.mxu0 0.0
        %347 = vmatpush1.msra.mxu0 %v309
        %348 = vmatprep.subr.mxu0 0.0
        %349 = vmatpush1.msra.mxu0 %v310
        %350 = vmatprep.subr.mxu0 0.0
        %351 = vmatpush1.msra.mxu0 0.0
        %352 = vmatprep.subr.mxu0 0.0
        %353 = vmatpush1.msra.mxu0 0.0
        %354 = vmatprep.subr.mxu0 0.0
        %355 = vmatpush1.msra.mxu0 0.0
        %356 = vmatprep.subr.mxu0 0.0
        %357 = vmatpush1.msra.mxu0 0.0
        %358 = vmatprep.subr.mxu0 0.0
        %359 = vmatpush1.msra.mxu0 0.0
        %360 = vmatprep.subr.mxu0 0.0
        %361 = vmatpush1.msra.mxu0 0.0
        %362 = vmatprep.subr.mxu0 0.0
        %363 = vmatpush1.msra.mxu0 0.0
        %364 = vmatprep.subr.mxu0 0.0
        %365 = vmatpush1.msra.mxu0 0.0
        %366 = vmatprep.subr.mxu0 0.0
        %367 = vmatpush1.msra.mxu0 0.0
        %368 = vmatprep.subr.mxu0 0.0
        %369 = vmatpush1.msra.mxu0 0.0
        %370 = vmatprep.subr.mxu0 0.0
        %371 = vmatpush1.msra.mxu0 0.0
        %372 = vmatprep.subr.mxu0 0.0
        %373 = vmatpush1.msra.mxu0 0.0
        %374 = vmatprep.subr.mxu0 0.0
        %375 = vmatpush1.msra.mxu0 0.0
        %376 = vmatprep.subr.mxu0 0.0
        %377 = vmatpush1.msra.mxu0 0.0
        %378 = vmatprep.subr.mxu0 0.0
        %379 = vmatpush1.msra.mxu0 0.0
        %380 = vmatprep.subr.mxu0 0.0
        %381 = vmatpush1.msra.mxu0 0.0
        %382 = vmatprep.mubr.f32.mxu0 0.0
        %383 = vmatmul.mubr.f32.gmra.mrb[0].mxu0 %v294
        %v384 = vpop.f32.mrb[0].mxu0
        %v385 = vadd.f32 %v316, %v384
        %v386 = vpop.f32.mrb[0].mxu0
        %387 = vdwg.mxu0
        %v388 = vxor.u32 %v385, 2147483648
        %v389 = vmul.f32 %v388, 1.442695
        %v390 = vpow.pop %v389
        %v391 = vadd.f32 %v390, 1.0
        %v392 = vrcp.pop %v391
        %v393 = vmul.f32 1.0, %v392
        %v394 = vmul.f32 %v385, %v393
        %v395 = vld [vmem:[%s3] sm:$0xff]
        %v396 = vld [vmem:[%s3 + $0x8] sm:$0xff]
        %v397 = vld [vmem:[%s3 + $0x10] sm:$0xff]
        %v398 = vld [vmem:[%s3 + $0x18] sm:$0xff]
        %v399 = vld [vmem:[%s3 + $0x20] sm:$0xff]
        %v400 = vld [vmem:[%s3 + $0x28] sm:$0xff]
        %v401 = vld [vmem:[%s3 + $0x30] sm:$0xff]
        %v402 = vld [vmem:[%s3 + $0x38] sm:$0xff]
        %v403 = vld [vmem:[%s4] sm:$0x1]
        %v405 = vlaneseq
        %v406 = vshrl.u32 %v405, 7
        %v407 = vsub.s32 0, %v406
        %v408 = vrot.slane %v403, %v407
        %vm410 = vcmask 523264
        %v412 = vsel %vm410, %v394, 0
        %414 = vmatprep.subr.mxu0 0.0
        %415 = vmatpush1.msra.mxu0 %v395
        %416 = vmatprep.subr.mxu0 0.0
        %417 = vmatpush1.msra.mxu0 %v396
        %418 = vmatprep.subr.mxu0 0.0
        %419 = vmatpush1.msra.mxu0 %v397
        %420 = vmatprep.subr.mxu0 0.0
        %421 = vmatpush1.msra.mxu0 %v398
        %422 = vmatprep.subr.mxu0 0.0
        %423 = vmatpush1.msra.mxu0 %v399
        %424 = vmatprep.subr.mxu0 0.0
        %425 = vmatpush1.msra.mxu0 %v400
        %426 = vmatprep.subr.mxu0 0.0
        %427 = vmatpush1.msra.mxu0 %v401
        %428 = vmatprep.subr.mxu0 0.0
        %429 = vmatpush1.msra.mxu0 %v402
        %430 = vmatprep.subr.mxu0 0.0
        %431 = vmatpush1.msra.mxu0 0.0
        %432 = vmatprep.subr.mxu0 0.0
        %433 = vmatpush1.msra.mxu0 0.0
        %434 = vmatprep.subr.mxu0 0.0
        %435 = vmatpush1.msra.mxu0 0.0
        %436 = vmatprep.subr.mxu0 0.0
        %437 = vmatpush1.msra.mxu0 0.0
        %438 = vmatprep.subr.mxu0 0.0
        %439 = vmatpush1.msra.mxu0 0.0
        %440 = vmatprep.subr.mxu0 0.0
        %441 = vmatpush1.msra.mxu0 0.0
        %442 = vmatprep.subr.mxu0 0.0
        %443 = vmatpush1.msra.mxu0 0.0
        %444 = vmatprep.subr.mxu0 0.0
        %445 = vmatpush1.msra.mxu0 0.0
        %446 = vmatprep.subr.mxu0 0.0
        %447 = vmatpush1.msra.mxu0 0.0
        %448 = vmatprep.subr.mxu0 0.0
        %449 = vmatpush1.msra.mxu0 0.0
        %450 = vmatprep.subr.mxu0 0.0
        %451 = vmatpush1.msra.mxu0 0.0
        %452 = vmatprep.subr.mxu0 0.0
        %453 = vmatpush1.msra.mxu0 0.0
        %454 = vmatprep.subr.mxu0 0.0
        %455 = vmatpush1.msra.mxu0 0.0
        %456 = vmatprep.subr.mxu0 0.0
        %457 = vmatpush1.msra.mxu0 0.0
        %458 = vmatprep.subr.mxu0 0.0
        %459 = vmatpush1.msra.mxu0 0.0
        %460 = vmatprep.subr.mxu0 0.0
        %461 = vmatpush1.msra.mxu0 0.0
        %462 = vmatprep.subr.mxu0 0.0
        %463 = vmatpush1.msra.mxu0 0.0
        %464 = vmatprep.subr.mxu0 0.0
        %465 = vmatpush1.msra.mxu0 0.0
        %466 = vmatprep.subr.mxu0 0.0
        %467 = vmatpush1.msra.mxu0 0.0
        %468 = vmatprep.subr.mxu0 0.0
        %469 = vmatpush1.msra.mxu0 0.0
        %470 = vmatprep.subr.mxu0 0.0
        %471 = vmatpush1.msra.mxu0 0.0
        %472 = vmatprep.subr.mxu0 0.0
        %473 = vmatpush1.msra.mxu0 0.0
        %474 = vmatprep.subr.mxu0 0.0
        %475 = vmatpush1.msra.mxu0 0.0
        %476 = vmatprep.subr.mxu0 0.0
        %477 = vmatpush1.msra.mxu0 0.0
        %478 = vmatprep.mubr.f32.mxu0 0.0
        %479 = vmatmul.mubr.f32.gmra.mrb[0].mxu0 %v412
        %v480 = vpop.f32.mrb[0].mxu0
        %v481 = vadd.f32 %v408, %v480
        %v482 = vpop.f32.mrb[0].mxu0
        %483 = vdwg.mxu0
        %v484 = vxor.u32 %v481, 2147483648
        %v485 = vmul.f32 %v484, 1.442695
        %v486 = vpow.pop %v485
        %v487 = vadd.f32 %v486, 1.0
        %v488 = vrcp.pop %v487
        %v489 = vmul.f32 1.0, %v488
        %v490 = vmul.f32 %v481, %v489
        %s491 = scalar_lea.vmem %s3, 64
        %v492 = vld [vmem:[%s491] sm:$0xff]
        %v493 = vld [vmem:[%s491 + $0x8] sm:$0xff]
        %v494 = vld [vmem:[%s491 + $0x10] sm:$0xff]
        %v495 = vld [vmem:[%s491 + $0x18] sm:$0xff]
        %v496 = vld [vmem:[%s491 + $0x20] sm:$0xff]
        %v497 = vld [vmem:[%s491 + $0x28] sm:$0xff]
        %v498 = vld [vmem:[%s491 + $0x30] sm:$0xff]
        %v499 = vld [vmem:[%s491 + $0x38] sm:$0xff]
        %s500 = scalar_lea.vmem %s4, 1
        %v501 = vld [vmem:[%s500] sm:$0x1]
        %v503 = vlaneseq
        %v504 = vshrl.u32 %v503, 7
        %v505 = vsub.s32 0, %v504
        %v506 = vrot.slane %v501, %v505
        %v509 = vsel %vm410, %v490, 0
        %511 = vmatprep.subr.mxu0 0.0
        %512 = vmatpush1.msra.mxu0 %v492
        %513 = vmatprep.subr.mxu0 0.0
        %514 = vmatpush1.msra.mxu0 %v493
        %515 = vmatprep.subr.mxu0 0.0
        %516 = vmatpush1.msra.mxu0 %v494
        %517 = vmatprep.subr.mxu0 0.0
        %518 = vmatpush1.msra.mxu0 %v495
        %519 = vmatprep.subr.mxu0 0.0
        %520 = vmatpush1.msra.mxu0 %v496
        %521 = vmatprep.subr.mxu0 0.0
        %522 = vmatpush1.msra.mxu0 %v497
        %523 = vmatprep.subr.mxu0 0.0
        %524 = vmatpush1.msra.mxu0 %v498
        %525 = vmatprep.subr.mxu0 0.0
        %526 = vmatpush1.msra.mxu0 %v499
        %527 = vmatprep.subr.mxu0 0.0
        %528 = vmatpush1.msra.mxu0 0.0
        %529 = vmatprep.subr.mxu0 0.0
        %530 = vmatpush1.msra.mxu0 0.0
        %531 = vmatprep.subr.mxu0 0.0
        %532 = vmatpush1.msra.mxu0 0.0
        %533 = vmatprep.subr.mxu0 0.0
        %534 = vmatpush1.msra.mxu0 0.0
        %535 = vmatprep.subr.mxu0 0.0
        %536 = vmatpush1.msra.mxu0 0.0
        %537 = vmatprep.subr.mxu0 0.0
        %538 = vmatpush1.msra.mxu0 0.0
        %539 = vmatprep.subr.mxu0 0.0
        %540 = vmatpush1.msra.mxu0 0.0
        %541 = vmatprep.subr.mxu0 0.0
        %542 = vmatpush1.msra.mxu0 0.0
        %543 = vmatprep.subr.mxu0 0.0
        %544 = vmatpush1.msra.mxu0 0.0
        %545 = vmatprep.subr.mxu0 0.0
        %546 = vmatpush1.msra.mxu0 0.0
        %547 = vmatprep.subr.mxu0 0.0
        %548 = vmatpush1.msra.mxu0 0.0
        %549 = vmatprep.subr.mxu0 0.0
        %550 = vmatpush1.msra.mxu0 0.0
        %551 = vmatprep.subr.mxu0 0.0
        %552 = vmatpush1.msra.mxu0 0.0
        %553 = vmatprep.subr.mxu0 0.0
        %554 = vmatpush1.msra.mxu0 0.0
        %555 = vmatprep.subr.mxu0 0.0
        %556 = vmatpush1.msra.mxu0 0.0
        %557 = vmatprep.subr.mxu0 0.0
        %558 = vmatpush1.msra.mxu0 0.0
        %559 = vmatprep.subr.mxu0 0.0
        %560 = vmatpush1.msra.mxu0 0.0
        %561 = vmatprep.subr.mxu0 0.0
        %562 = vmatpush1.msra.mxu0 0.0
        %563 = vmatprep.subr.mxu0 0.0
        %564 = vmatpush1.msra.mxu0 0.0
        %565 = vmatprep.subr.mxu0 0.0
        %566 = vmatpush1.msra.mxu0 0.0
        %567 = vmatprep.subr.mxu0 0.0
        %568 = vmatpush1.msra.mxu0 0.0
        %569 = vmatprep.subr.mxu0 0.0
        %570 = vmatpush1.msra.mxu0 0.0
        %571 = vmatprep.subr.mxu0 0.0
        %572 = vmatpush1.msra.mxu0 0.0
        %573 = vmatprep.subr.mxu0 0.0
        %574 = vmatpush1.msra.mxu0 0.0
        %575 = vmatprep.mubr.f32.mxu0 0.0
        %576 = vmatmul.mubr.f32.gmra.mrb[0].mxu0 %v509
        %v577 = vpop.f32.mrb[0].mxu0
        %v578 = vadd.f32 %v506, %v577
        %v579 = vpop.f32.mrb[0].mxu0
        %580 = vdwg.mxu0
        %v581 = vxor.u32 %v578, 2147483648
        %v582 = vmul.f32 %v581, 1.442695
        %v583 = vpow.pop %v582
        %v584 = vadd.f32 %v583, 1.0
        %v585 = vrcp.pop %v584
        %v586 = vmul.f32 1.0, %v585
        %v587 = vmul.f32 %v578, %v586
        %v588 = vld [vmem:[%s5] sm:$0xff]
        %v589 = vld [vmem:[%s5 + $0x8] sm:$0xff]
        %v590 = vld [vmem:[%s5 + $0x10] sm:$0xff]
        %v591 = vld [vmem:[%s5 + $0x18] sm:$0xff]
        %v592 = vld [vmem:[%s5 + $0x20] sm:$0xff]
        %v593 = vld [vmem:[%s5 + $0x28] sm:$0xff]
        %v594 = vld [vmem:[%s5 + $0x30] sm:$0xff]
        %v595 = vld [vmem:[%s5 + $0x38] sm:$0xff]
        %v596 = vld [vmem:[%s6] sm:$0x1]
        %v598 = vlaneseq
        %v599 = vshrl.u32 %v598, 7
        %v600 = vsub.s32 0, %v599
        %v601 = vrot.slane %v596, %v600
        %v604 = vsel %vm410, %v587, 0
        %606 = vmatprep.subr.mxu0 0.0
        %607 = vmatpush1.msra.mxu0 %v588
        %608 = vmatprep.subr.mxu0 0.0
        %609 = vmatpush1.msra.mxu0 %v589
        %610 = vmatprep.subr.mxu0 0.0
        %611 = vmatpush1.msra.mxu0 %v590
        %612 = vmatprep.subr.mxu0 0.0
        %613 = vmatpush1.msra.mxu0 %v591
        %614 = vmatprep.subr.mxu0 0.0
        %615 = vmatpush1.msra.mxu0 %v592
        %616 = vmatprep.subr.mxu0 0.0
        %617 = vmatpush1.msra.mxu0 %v593
        %618 = vmatprep.subr.mxu0 0.0
        %619 = vmatpush1.msra.mxu0 %v594
        %620 = vmatprep.subr.mxu0 0.0
        %621 = vmatpush1.msra.mxu0 %v595
        %622 = vmatprep.subr.mxu0 0.0
        %623 = vmatpush1.msra.mxu0 0.0
        %624 = vmatprep.subr.mxu0 0.0
        %625 = vmatpush1.msra.mxu0 0.0
        %626 = vmatprep.subr.mxu0 0.0
        %627 = vmatpush1.msra.mxu0 0.0
        %628 = vmatprep.subr.mxu0 0.0
        %629 = vmatpush1.msra.mxu0 0.0
        %630 = vmatprep.subr.mxu0 0.0
        %631 = vmatpush1.msra.mxu0 0.0
        %632 = vmatprep.subr.mxu0 0.0
        %633 = vmatpush1.msra.mxu0 0.0
        %634 = vmatprep.subr.mxu0 0.0
        %635 = vmatpush1.msra.mxu0 0.0
        %636 = vmatprep.subr.mxu0 0.0
        %637 = vmatpush1.msra.mxu0 0.0
        %638 = vmatprep.subr.mxu0 0.0
        %639 = vmatpush1.msra.mxu0 0.0
        %640 = vmatprep.subr.mxu0 0.0
        %641 = vmatpush1.msra.mxu0 0.0
        %642 = vmatprep.subr.mxu0 0.0
        %643 = vmatpush1.msra.mxu0 0.0
        %644 = vmatprep.subr.mxu0 0.0
        %645 = vmatpush1.msra.mxu0 0.0
        %646 = vmatprep.subr.mxu0 0.0
        %647 = vmatpush1.msra.mxu0 0.0
        %648 = vmatprep.subr.mxu0 0.0
        %649 = vmatpush1.msra.mxu0 0.0
        %650 = vmatprep.subr.mxu0 0.0
        %651 = vmatpush1.msra.mxu0 0.0
        %652 = vmatprep.subr.mxu0 0.0
        %653 = vmatpush1.msra.mxu0 0.0
        %654 = vmatprep.subr.mxu0 0.0
        %655 = vmatpush1.msra.mxu0 0.0
        %656 = vmatprep.subr.mxu0 0.0
        %657 = vmatpush1.msra.mxu0 0.0
        %658 = vmatprep.subr.mxu0 0.0
        %659 = vmatpush1.msra.mxu0 0.0
        %660 = vmatprep.subr.mxu0 0.0
        %661 = vmatpush1.msra.mxu0 0.0
        %662 = vmatprep.subr.mxu0 0.0
        %663 = vmatpush1.msra.mxu0 0.0
        %664 = vmatprep.subr.mxu0 0.0
        %665 = vmatpush1.msra.mxu0 0.0
        %666 = vmatprep.subr.mxu0 0.0
        %667 = vmatpush1.msra.mxu0 0.0
        %668 = vmatprep.subr.mxu0 0.0
        %669 = vmatpush1.msra.mxu0 0.0
        %670 = vmatprep.mubr.f32.mxu0 0.0
        %671 = vmatmul.mubr.f32.gmra.mrb[0].mxu0 %v604
        %v672 = vpop.f32.mrb[0].mxu0
        %v673 = vadd.f32 %v601, %v672
        %v674 = vpop.f32.mrb[0].mxu0
        %675 = vdwg.mxu0
        %676 = vst [vmem:[%s293] sm:$0xff] %v673
        %s677 = sand.u32 %s184, 1
        %s678 = scalar_lea.sflag [#allocation4], %s677
        %s679 = sand.u32 %s184, 1
        %s680 = smul.addr %s679, 8
        %s681 = scalar_lea.vmem [#allocation5], %s680
        // Predicated region
        $region53: #{tpu_custom_call.1} parent=47 // pred_check
          %p682 = pneg %p194
        $region54: #{tpu_custom_call.1} parent=47 // pred_check_branch
          %684 = sbr.rel (%p682) target = $region56
        $region55: #{tpu_custom_call.1} parent=47 // pred_region
          %s686 = ssub.s32 128, 128
          %687 = vsyncadd %s678, %s686
          %s688 = smul.addr %s24, 128
          %s689 = scalar_lea.hbm %s7, %s688
          %s691 = sshll.u32 %s681, 4
          %s692 = int_to_ptr.vmem [resolvable:$true] %s691
          %694 = dma.vmem_to_hbm [thread:$0]  %s692, 128, %s689, %s678
        $region56: #{tpu_custom_call.1} parent=47 // pred_fallthru
          _
      $region48: #{tpu_custom_call.1} parent=5 // pred_fallthru
        _
      %p695 = scmp.le.s32.totalorder 2, %s19
      // Predicated region
      $region57: #{tpu_custom_call.1} parent=5 // pred_check
        %p696 = pneg %p695
      $region58: #{tpu_custom_call.1} parent=5 // pred_check_branch
        %698 = sbr.rel (%p696) target = $region60
      $region59: #{tpu_custom_call.1} parent=5 // pred_region
        %s699 = ssub.s32 %s19, 2
        // Predicated region
        $region61: #{tpu_custom_call.1} parent=59 // pred_check
          %p700 = pneg %p200
        $region62: #{tpu_custom_call.1} parent=59 // pred_check_branch
          %702 = sbr.rel (%p700) target = $region64
        $region63: #{tpu_custom_call.1} parent=59 // pred_region
          %s703 = sand.u32 %s185, 1
          %s704 = scalar_lea.sflag [#allocation4], %s703
          %s705 = sand.u32 %s185, 1
          %s706 = smul.addr %s705, 8
          %s707 = scalar_lea.vmem [#allocation5], %s706
          %708 = dma.done %s704, 128
        $region64: #{tpu_custom_call.1} parent=59 // pred_fallthru
          _
      $region60: #{tpu_custom_call.1} parent=5 // pred_fallthru
        _
    $region6: #{tpu_custom_call.1} parent=1 // loop_footer
      %s23 = sadd.s32 1, %s19
    $region7: #{tpu_custom_call.1} parent=1 // loop_footer_branch
      %18 = sbr.rel target = $region3
    $region8: #{tpu_custom_call.1} parent=1 // loop_exit
      _
    %709 = vsyncpa [#allocation3], 1
    %s710 = scalar_lea.sflag [#allocation3], 1
    %711 = vsyncpa %s710, 1
    %712 = vsyncpa [#allocation4], 1
    %s713 = scalar_lea.sflag [#allocation4], 1
    %714 = vsyncpa %s713, 1

</llo_original>
